<compile_context>
chip_gen: v7x
topology: tpu7x:2x2x1
jax: 0.10.0
libtpu: 0.0.40
codegen_flags: <defaults>
</compile_context>

<pallas_src>
import jax
import jax.numpy as jnp
from jax.experimental import pallas as pl
from jax.experimental.pallas import tpu as pltpu

NUM_EMBED = 192
HIDDEN = 4 * NUM_EMBED  # 768


def _cdiv(a, b):
    return -(-a // b)


def _round_up(n, m):
    return _cdiv(n, m) * m


def _gelu_exact(x):
    # PyTorch nn.GELU() default (approximate='none'): 0.5*x*(1+erf(x/sqrt(2)))
    return 0.5 * x * (1.0 + jax.lax.erf(x * jnp.float32(0.7071067811865476)))


def mlp_kernel(x_ref, w1_ref, b1_ref, w2_ref, b2_ref, o_ref):
    # Cast x to bf16 in-kernel (cheap VPU op) so the wrapper doesn't add an
    # extra HBM pass over the activations.
    x = x_ref[...].astype(w1_ref.dtype)                            # (tm, D) bf16
    # fc1: bf16 x bf16 on the MXU, f32 accumulation.
    h = jnp.dot(x, w1_ref[...], preferred_element_type=jnp.float32)
    h = h + b1_ref[...]                                            # f32 bias add
    h = _gelu_exact(h)                                             # exact GELU, f32
    # fc2: cast activations back to bf16 for the MXU, accumulate in f32.
    y = jnp.dot(h.astype(w2_ref.dtype), w2_ref[...],
                preferred_element_type=jnp.float32)
    o_ref[...] = (y + b2_ref[...]).astype(o_ref.dtype)             # (tm, D)


def _choose_row_tile(n_rows, tm_max):
    """Balanced row tile.

    - At most tm_max rows per tile (VMEM budget).
    - >=2 tiles when n_rows >= 256 (v7x has 2 TensorCores), >=4 when >= 2048
      (keeps the input/output DMA double-buffer pipeline filled).
    - Tiles balanced (cdiv) so tail padding is bounded, then rounded up to a
      multiple of 16 (sublane-friendly for f32 blocks and bf16 packing).
    """
    n_tiles = _cdiv(n_rows, tm_max)
    if n_rows >= 2048:
        n_tiles = max(n_tiles, 4)
    elif n_rows >= 256:
        n_tiles = max(n_tiles, 2)
    tm = _round_up(_cdiv(n_rows, n_tiles), 16)
    if tm > n_rows:
        # Never request a block larger than the array: use a multiple of 8
        # (ragged last block handled by Pallas) or the full extent for tiny N.
        tm = n_rows if n_rows < 8 else (n_rows // 8) * 8
    return tm


def mlp_block(x, w1, b1, w2, b2, *, tm=1024, compute_dtype=jnp.bfloat16):
    """x: (B, T, D) float32. w1: (D, H), b1: (H,), w2: (H, D), b2: (D,).

    Returns (B, T, D) in x.dtype (fc2(gelu(fc1(x))), exact GELU). MXU operands
    are cast to `compute_dtype` (bf16); accumulation, bias adds and GELU are f32.
    Weights are stored (in_features, out_features), i.e. x @ W + b, equivalent to
    PyTorch's x @ W.T + b with W of shape (out, in).
    """
    B, T, D = x.shape
    N = B * T
    assert D == NUM_EMBED
    assert w1.shape == (NUM_EMBED, HIDDEN)
    assert w2.shape == (HIDDEN, NUM_EMBED)

    tm_eff = _choose_row_tile(N, tm)
    grid = _cdiv(N, tm_eff)

    x2 = x.reshape(N, D)                       # f32; cast happens in the kernel
    # Weights are tiny (~0.6 MiB in bf16): cast once in the wrapper so every
    # grid step streams half the weight bytes.
    w1c = w1.astype(compute_dtype)
    w2c = w2.astype(compute_dtype)
    b1_2 = b1.reshape(1, HIDDEN).astype(jnp.float32)
    b2_2 = b2.reshape(1, D).astype(jnp.float32)

    welt = jnp.dtype(compute_dtype).itemsize
    cost = pl.CostEstimate(
        flops=4 * N * D * HIDDEN,                         # two matmuls
        transcendentals=N * HIDDEN,                       # erf per hidden element
        bytes_accessed=(N * D * 4                         # x in (f32)
                        + (D * HIDDEN + HIDDEN * D) * welt  # bf16 weights
                        + (HIDDEN + D) * 4                  # biases
                        + N * D * 4),                       # out (f32)
    )

    out = pl.pallas_call(
        mlp_kernel,
        out_shape=jax.ShapeDtypeStruct((N, D), x.dtype),
        grid_spec=pltpu.PrefetchScalarGridSpec(
            num_scalar_prefetch=0,
            grid=(grid,),
            in_specs=[
                pl.BlockSpec((tm_eff, D), lambda i: (i, 0)),     # x rows (f32)
                pl.BlockSpec((D, HIDDEN), lambda i: (0, 0)),     # w1 (resident)
                pl.BlockSpec((1, HIDDEN), lambda i: (0, 0)),     # b1
                pl.BlockSpec((HIDDEN, D), lambda i: (0, 0)),     # w2 (resident)
                pl.BlockSpec((1, D), lambda i: (0, 0)),          # b2
            ],
            out_specs=pl.BlockSpec((tm_eff, D), lambda i: (i, 0)),
        ),
        compiler_params=pltpu.CompilerParams(
            dimension_semantics=("parallel",),     # shards grid steps across TCs
            vmem_limit_bytes=32 * 1024 * 1024,     # headroom for tm=1024 blocks
        ),
        cost_estimate=cost,
    )(x2, w1c, b1_2, w2c, b2_2)

    return out.reshape(B, T, D)


if __name__ == "__main__":
    key = jax.random.PRNGKey(0)
    k_x, k_w1, k_b1, k_w2, k_b2 = jax.random.split(key, 5)

    B, T = 2, 8  # small shapes; N = 16 rows
    x = jax.random.normal(k_x, (B, T, NUM_EMBED), dtype=jnp.float32)

    # Deterministic synthetic parameters (not a checkpoint load).
    scale1 = 1.0 / jnp.sqrt(jnp.float32(NUM_EMBED))
    scale2 = 1.0 / jnp.sqrt(jnp.float32(HIDDEN))
    w1 = jax.random.uniform(k_w1, (NUM_EMBED, HIDDEN), jnp.float32, -scale1, scale1)
    b1 = jax.random.uniform(k_b1, (HIDDEN,), jnp.float32, -scale1, scale1)
    w2 = jax.random.uniform(k_w2, (HIDDEN, NUM_EMBED), jnp.float32, -scale2, scale2)
    b2 = jax.random.uniform(k_b2, (NUM_EMBED,), jnp.float32, -scale2, scale2)

    out = mlp_block(x, w1, b1, w2, b2)
    out = jax.block_until_ready(out)

    # Pure-JAX f32 reference (same semantics as PyTorch fc2(gelu(fc1(x)))).
    h_ref = x.reshape(-1, NUM_EMBED) @ w1 + b1
    h_ref = 0.5 * h_ref * (1.0 + jax.lax.erf(h_ref / jnp.sqrt(2.0)))
    ref = (h_ref @ w2 + b2).reshape(B, T, NUM_EMBED)

    assert out.shape == (B, T, NUM_EMBED)
    # bf16 MXU operands with f32 accumulation => loosened tolerance vs f32 ref.
    assert jnp.allclose(out, ref, atol=2e-2, rtol=2e-2), "mismatch vs reference"
    print("KERNEL_OK")
</pallas_src>

<mosaic_0001>
module attributes {stable_mosaic.version = 11 : i64} {
  func.func @mlp_kernel(%arg0: i32, %arg1: memref<16x192xf32, #tpu.memory_space<vmem>>, %arg2: memref<192x768xbf16, #tpu.memory_space<vmem>>, %arg3: memref<1x768xf32, #tpu.memory_space<vmem>>, %arg4: memref<768x192xbf16, #tpu.memory_space<vmem>>, %arg5: memref<1x192xf32, #tpu.memory_space<vmem>>, %arg6: memref<16x192xf32, #tpu.memory_space<vmem>>) attributes {dimension_semantics = [#tpu.dimension_semantics<parallel>], iteration_bounds = array<i64: 1>, scalar_prefetch = 0 : i64, scratch_operands = 0 : i64, tpu.core_type = #tpu.core_type<tc>, window_params = [{transform_indices = @transform_0, window_bounds = array<i64: 16, 192>}, {pipeline_mode = #tpu.pipeline_mode<synchronous>, transform_indices = @transform_1, window_bounds = array<i64: 192, 768>}, {pipeline_mode = #tpu.pipeline_mode<synchronous>, transform_indices = @transform_2, window_bounds = array<i64: 1, 768>}, {pipeline_mode = #tpu.pipeline_mode<synchronous>, transform_indices = @transform_3, window_bounds = array<i64: 768, 192>}, {pipeline_mode = #tpu.pipeline_mode<synchronous>, transform_indices = @transform_4, window_bounds = array<i64: 1, 192>}, {transform_indices = @transform_5, window_bounds = array<i64: 16, 192>}]} {
    %c0 = arith.constant 0 : index
    %c0_0 = arith.constant 0 : index
    %0 = vector.load %arg1[%c0, %c0_0] : memref<16x192xf32, #tpu.memory_space<vmem>>, vector<16x192xf32>
    %1 = arith.truncf %0 : vector<16x192xf32> to vector<16x192xbf16>
    %c0_1 = arith.constant 0 : index
    %c0_2 = arith.constant 0 : index
    %2 = vector.load %arg2[%c0_1, %c0_2] : memref<192x768xbf16, #tpu.memory_space<vmem>>, vector<192x768xbf16>
    %cst = arith.constant dense<0.000000e+00> : vector<16x768xf32>
    %3 = tpu.matmul %1, %2, %cst {dimension_numbers = #tpu.dot_dimension_numbers<[1], [0], [0], [1], [0, 0, 1, 1], [], []>} : vector<16x192xbf16>, vector<192x768xbf16>, vector<16x768xf32> -> vector<16x768xf32>
    %c0_3 = arith.constant 0 : index
    %c0_4 = arith.constant 0 : index
    %4 = vector.load %arg3[%c0_3, %c0_4] : memref<1x768xf32, #tpu.memory_space<vmem>>, vector<1x768xf32>
    %5 = vector.broadcast %4 : vector<1x768xf32> to vector<16x768xf32>
    %6 = arith.addf %3, %5 : vector<16x768xf32>
    %cst_5 = arith.constant 5.000000e-01 : f32
    %7 = vector.broadcast %cst_5 : f32 to vector<16x768xf32>
    %8 = arith.mulf %7, %6 : vector<16x768xf32>
    %cst_6 = arith.constant 0.707106769 : f32
    %9 = vector.broadcast %cst_6 : f32 to vector<16x768xf32>
    %10 = arith.mulf %6, %9 : vector<16x768xf32>
    %11 = math.erf %10 : vector<16x768xf32>
    %cst_7 = arith.constant 1.000000e+00 : f32
    %12 = vector.broadcast %cst_7 : f32 to vector<16x768xf32>
    %13 = arith.addf %12, %11 : vector<16x768xf32>
    %14 = arith.mulf %8, %13 : vector<16x768xf32>
    %15 = arith.truncf %14 : vector<16x768xf32> to vector<16x768xbf16>
    %c0_8 = arith.constant 0 : index
    %c0_9 = arith.constant 0 : index
    %16 = vector.load %arg4[%c0_8, %c0_9] : memref<768x192xbf16, #tpu.memory_space<vmem>>, vector<768x192xbf16>
    %cst_10 = arith.constant dense<0.000000e+00> : vector<16x192xf32>
    %17 = tpu.matmul %15, %16, %cst_10 {dimension_numbers = #tpu.dot_dimension_numbers<[1], [0], [0], [1], [0, 0, 1, 1], [], []>} : vector<16x768xbf16>, vector<768x192xbf16>, vector<16x192xf32> -> vector<16x192xf32>
    %c0_11 = arith.constant 0 : index
    %c0_12 = arith.constant 0 : index
    %18 = vector.load %arg5[%c0_11, %c0_12] : memref<1x192xf32, #tpu.memory_space<vmem>>, vector<1x192xf32>
    %19 = vector.broadcast %18 : vector<1x192xf32> to vector<16x192xf32>
    %20 = arith.addf %17, %19 : vector<16x192xf32>
    %c0_13 = arith.constant 0 : index
    %c0_14 = arith.constant 0 : index
    %21 = vector.load %arg6[%c0_13, %c0_14] : memref<16x192xf32, #tpu.memory_space<vmem>>, vector<16x192xf32>
    tpu.vector_store %arg6[%c0_13, %c0_14], %20 {strides = array<i32>} : memref<16x192xf32, #tpu.memory_space<vmem>>, vector<16x192xf32>,
    return
  }
  func.func @transform_0(%arg0: i32) -> (i32, i32) {
    %c0_i32 = arith.constant 0 : i32
    %c0_i32_0 = arith.constant 0 : i32
    return %arg0, %c0_i32 : i32, i32
  }
  func.func @transform_1(%arg0: i32) -> (i32, i32) {
    %c0_i32 = arith.constant 0 : i32
    %c0_i32_0 = arith.constant 0 : i32
    %c0_i32_1 = arith.constant 0 : i32
    return %c0_i32, %c0_i32_0 : i32, i32
  }
  func.func @transform_2(%arg0: i32) -> (i32, i32) {
    %c0_i32 = arith.constant 0 : i32
    %c0_i32_0 = arith.constant 0 : i32
    %c0_i32_1 = arith.constant 0 : i32
    return %c0_i32, %c0_i32_0 : i32, i32
  }
  func.func @transform_3(%arg0: i32) -> (i32, i32) {
    %c0_i32 = arith.constant 0 : i32
    %c0_i32_0 = arith.constant 0 : i32
    %c0_i32_1 = arith.constant 0 : i32
    return %c0_i32, %c0_i32_0 : i32, i32
  }
  func.func @transform_4(%arg0: i32) -> (i32, i32) {
    %c0_i32 = arith.constant 0 : i32
    %c0_i32_0 = arith.constant 0 : i32
    %c0_i32_1 = arith.constant 0 : i32
    return %c0_i32, %c0_i32_0 : i32, i32
  }
  func.func @transform_5(%arg0: i32) -> (i32, i32) {
    %c0_i32 = arith.constant 0 : i32
    %c0_i32_0 = arith.constant 0 : i32
    return %arg0, %c0_i32 : i32, i32
  }
}

</mosaic_0001>

<llo_original>
// kernel: tpu_custom_call.1
$region0: #{tpu_custom_call.1}
  #allocation0 [shape = 'u32[]', space=smem, size = 0x4, offset = 0x4, fixed_abs, tag = 'smem constant byte address 0x4 - core index']
  #allocation1 [shape = 'u32[144,128]{1,0:T(1,128)}', space=vmem, size = 0x12000, scoped, tag = 'internal scratch']
  %s0 = inlined_call_operand.vmem [shape: f32[16,192], index: 0, kind: input, shape index: {}]
  %s1 = inlined_call_operand.vmem [shape: bf16[192,768], index: 1, kind: input, shape index: {}]
  %s2 = inlined_call_operand.vmem [shape: f32[1,768], index: 2, kind: input, shape index: {}]
  %s3 = inlined_call_operand.vmem [shape: bf16[768,192], index: 3, kind: input, shape index: {}]
  %s4 = inlined_call_operand.vmem [shape: f32[1,192], index: 4, kind: input, shape index: {}]
  %s5 = inlined_call_operand.hbm [shape: f32[16,192], index: 5, kind: output, shape index: {}]
  %s6 = sld [smem:[#allocation0]]
  $region30: #{tpu_custom_call.1} parent=0
    _
  %s8 = ssub.s32 1, %s6
  %s9 = scalar_select 0, %s8, %s6
  $region1: #{tpu_custom_call.1} parent=0
    #allocation2 [shape = 'u8[16384]{0}', space=vmem, size = 0x4000, scoped, tag = 'output window, operand 0, single buffered']
    #allocation3 [shape = 's32[1]{0}', space=sflag, size = 0x4, scoped, tag = 'scoped memory for tpu_custom_call.1']
    %10 = vsyncpa [#allocation3], 0
    // Predicated region
    $region2: #{tpu_custom_call.1} parent=1 // pred_check
      _
    $region3: #{tpu_custom_call.1} parent=1 // pred_check_branch
      %12 = sbr.rel (0) target = $region5
    $region4: #{tpu_custom_call.1} parent=1 // pred_region
      _
    $region5: #{tpu_custom_call.1} parent=1 // pred_fallthru
      _
    // Predicated region
    $region6: #{tpu_custom_call.1} parent=1 // pred_check
      _
    $region7: #{tpu_custom_call.1} parent=1 // pred_check_branch
      %14 = sbr.rel (0) target = $region9
    $region8: #{tpu_custom_call.1} parent=1 // pred_region
      _
    $region9: #{tpu_custom_call.1} parent=1 // pred_fallthru
      _
    // Predicated region
    $region10: #{tpu_custom_call.1} parent=1 // pred_check
      _
    $region11: #{tpu_custom_call.1} parent=1 // pred_check_branch
      %16 = sbr.rel (0) target = $region13
    $region12: #{tpu_custom_call.1} parent=1 // pred_region
      _
    $region13: #{tpu_custom_call.1} parent=1 // pred_fallthru
      _
    // Predicated region
    $region14: #{tpu_custom_call.1} parent=1 // pred_check
      _
    $region15: #{tpu_custom_call.1} parent=1 // pred_check_branch
      %18 = sbr.rel (0) target = $region17
    $region16: #{tpu_custom_call.1} parent=1 // pred_region
      _
    $region17: #{tpu_custom_call.1} parent=1 // pred_fallthru
      _
    // Predicated region
    $region18: #{tpu_custom_call.1} parent=1 // pred_check
      _
    $region19: #{tpu_custom_call.1} parent=1 // pred_check_branch
      %20 = sbr.rel (0) target = $region21
    $region20: #{tpu_custom_call.1} parent=1 // pred_region
      _
    $region21: #{tpu_custom_call.1} parent=1 // pred_fallthru
      _
    %v22 = vld [vmem:[%s0] sm:$0xff]
    %v23 = vld [vmem:[%s0 + $0x8] sm:$0xff]
    %v24 = vld [vmem:[%s0 + $0x10] sm:$0xff]
    %v25 = vld [vmem:[%s0 + $0x18] sm:$0xff]
    %v26 = vpack.c.bf16 %v24, %v22
    %v27 = vpack.c.bf16 %v25, %v23
    %v28 = vld [vmem:[%s1] sm:$0xff]
    %v29 = vld [vmem:[%s1 + $0x8] sm:$0xff]
    %v30 = vld [vmem:[%s1 + $0x10] sm:$0xff]
    %v31 = vld [vmem:[%s1 + $0x18] sm:$0xff]
    %v32 = vld [vmem:[%s1 + $0x20] sm:$0xff]
    %v33 = vld [vmem:[%s1 + $0x28] sm:$0xff]
    %v34 = vld [vmem:[%s1 + $0x30] sm:$0xff]
    %v35 = vld [vmem:[%s1 + $0x38] sm:$0xff]
    %v36 = vld [vmem:[%s1 + $0x40] sm:$0xff]
    %v37 = vld [vmem:[%s1 + $0x48] sm:$0xff]
    %v38 = vld [vmem:[%s1 + $0x50] sm:$0xff]
    %v39 = vld [vmem:[%s1 + $0x58] sm:$0xff]
    %v40 = vld [vmem:[%s1 + $0x60] sm:$0xff]
    %v41 = vld [vmem:[%s1 + $0x68] sm:$0xff]
    %v42 = vld [vmem:[%s1 + $0x70] sm:$0xff]
    %v43 = vld [vmem:[%s1 + $0x78] sm:$0xff]
    %v44 = vld [vmem:[%s1 + $0x80] sm:$0xff]
    %v45 = vld [vmem:[%s1 + $0x88] sm:$0xff]
    %v46 = vld [vmem:[%s1 + $0x90] sm:$0xff]
    %v47 = vld [vmem:[%s1 + $0x98] sm:$0xff]
    %v48 = vld [vmem:[%s1 + $0xa0] sm:$0xff]
    %v49 = vld [vmem:[%s1 + $0xa8] sm:$0xff]
    %v50 = vld [vmem:[%s1 + $0xb0] sm:$0xff]
    %v51 = vld [vmem:[%s1 + $0xb8] sm:$0xff]
    %v52 = vld [vmem:[%s1 + $0xc0] sm:$0xff]
    %v53 = vld [vmem:[%s1 + $0xc8] sm:$0xff]
    %v54 = vld [vmem:[%s1 + $0xd0] sm:$0xff]
    %v55 = vld [vmem:[%s1 + $0xd8] sm:$0xff]
    %v56 = vld [vmem:[%s1 + $0xe0] sm:$0xff]
    %v57 = vld [vmem:[%s1 + $0xe8] sm:$0xff]
    %v58 = vld [vmem:[%s1 + $0xf0] sm:$0xff]
    %v59 = vld [vmem:[%s1 + $0xf8] sm:$0xff]
    %v60 = vld [vmem:[%s1 + $0x100] sm:$0xff]
    %v61 = vld [vmem:[%s1 + $0x108] sm:$0xff]
    %v62 = vld [vmem:[%s1 + $0x110] sm:$0xff]
    %v63 = vld [vmem:[%s1 + $0x118] sm:$0xff]
    %v64 = vld [vmem:[%s1 + $0x120] sm:$0xff]
    %v65 = vld [vmem:[%s1 + $0x128] sm:$0xff]
    %v66 = vld [vmem:[%s1 + $0x130] sm:$0xff]
    %v67 = vld [vmem:[%s1 + $0x138] sm:$0xff]
    %v68 = vld [vmem:[%s1 + $0x140] sm:$0xff]
    %v69 = vld [vmem:[%s1 + $0x148] sm:$0xff]
    %v70 = vld [vmem:[%s1 + $0x150] sm:$0xff]
    %v71 = vld [vmem:[%s1 + $0x158] sm:$0xff]
    %v72 = vld [vmem:[%s1 + $0x160] sm:$0xff]
    %v73 = vld [vmem:[%s1 + $0x168] sm:$0xff]
    %v74 = vld [vmem:[%s1 + $0x170] sm:$0xff]
    %v75 = vld [vmem:[%s1 + $0x178] sm:$0xff]
    %v76 = vld [vmem:[%s1 + $0x180] sm:$0xff]
    %v77 = vld [vmem:[%s1 + $0x188] sm:$0xff]
    %v78 = vld [vmem:[%s1 + $0x190] sm:$0xff]
    %v79 = vld [vmem:[%s1 + $0x198] sm:$0xff]
    %v80 = vld [vmem:[%s1 + $0x1a0] sm:$0xff]
    %v81 = vld [vmem:[%s1 + $0x1a8] sm:$0xff]
    %v82 = vld [vmem:[%s1 + $0x1b0] sm:$0xff]
    %v83 = vld [vmem:[%s1 + $0x1b8] sm:$0xff]
    %v84 = vld [vmem:[%s1 + $0x1c0] sm:$0xff]
    %v85 = vld [vmem:[%s1 + $0x1c8] sm:$0xff]
    %v86 = vld [vmem:[%s1 + $0x1d0] sm:$0xff]
    %v87 = vld [vmem:[%s1 + $0x1d8] sm:$0xff]
    %v88 = vld [vmem:[%s1 + $0x1e0] sm:$0xff]
    %v89 = vld [vmem:[%s1 + $0x1e8] sm:$0xff]
    %v90 = vld [vmem:[%s1 + $0x1f0] sm:$0xff]
    %v91 = vld [vmem:[%s1 + $0x1f8] sm:$0xff]
    %v92 = vld [vmem:[%s1 + $0x200] sm:$0xff]
    %v93 = vld [vmem:[%s1 + $0x208] sm:$0xff]
    %v94 = vld [vmem:[%s1 + $0x210] sm:$0xff]
    %v95 = vld [vmem:[%s1 + $0x218] sm:$0xff]
    %v96 = vld [vmem:[%s1 + $0x220] sm:$0xff]
    %v97 = vld [vmem:[%s1 + $0x228] sm:$0xff]
    %v98 = vld [vmem:[%s1 + $0x230] sm:$0xff]
    %v99 = vld [vmem:[%s1 + $0x238] sm:$0xff]
    %v100 = vld [vmem:[%s2] sm:$0x3f]
    %v102 = vlaneseq
    %v103 = vshrl.u32 %v102, 7
    %v104 = vsub.s32 0, %v103
    %v105 = vrot.slane %v100, %v104
    %v106 = vlaneseq
    %v107 = vshrl.u32 %v106, 7
    %v108 = vsub.s32 1, %v107
    %v109 = vrot.slane %v100, %v108
    %v110 = vlaneseq
    %v111 = vshrl.u32 %v110, 7
    %v112 = vsub.s32 2, %v111
    %v113 = vrot.slane %v100, %v112
    %v114 = vlaneseq
    %v115 = vshrl.u32 %v114, 7
    %v116 = vsub.s32 3, %v115
    %v117 = vrot.slane %v100, %v116
    %v118 = vlaneseq
    %v119 = vshrl.u32 %v118, 7
    %v120 = vsub.s32 4, %v119
    %v121 = vrot.slane %v100, %v120
    %v122 = vlaneseq
    %v123 = vshrl.u32 %v122, 7
    %v124 = vsub.s32 5, %v123
    %v125 = vrot.slane %v100, %v124
    %v204 = vunpack.c.l.b16 %v28
    %v205 = vunpack.c.h.b16 %v28
    %v206 = vunpack.c.l.b16 %v29
    %v207 = vunpack.c.h.b16 %v29
    %v208 = vunpack.c.l.b16 %v30
    %v209 = vunpack.c.h.b16 %v30
    %v210 = vunpack.c.l.b16 %v31
    %v211 = vunpack.c.h.b16 %v31
    %v212 = vunpack.c.l.b16 %v32
    %v213 = vunpack.c.h.b16 %v32
    %v214 = vunpack.c.l.b16 %v33
    %v215 = vunpack.c.h.b16 %v33
    %v216 = vunpack.c.l.b16 %v34
    %v217 = vunpack.c.h.b16 %v34
    %v218 = vunpack.c.l.b16 %v35
    %v219 = vunpack.c.h.b16 %v35
    %v220 = vunpack.c.l.b16 %v36
    %v221 = vunpack.c.h.b16 %v36
    %v222 = vunpack.c.l.b16 %v37
    %v223 = vunpack.c.h.b16 %v37
    %v224 = vunpack.c.l.b16 %v38
    %v225 = vunpack.c.h.b16 %v38
    %v226 = vunpack.c.l.b16 %v39
    %v227 = vunpack.c.h.b16 %v39
    %v228 = vunpack.c.l.b16 %v40
    %v229 = vunpack.c.h.b16 %v40
    %v230 = vunpack.c.l.b16 %v41
    %v231 = vunpack.c.h.b16 %v41
    %v232 = vunpack.c.l.b16 %v42
    %v233 = vunpack.c.h.b16 %v42
    %v234 = vunpack.c.l.b16 %v43
    %v235 = vunpack.c.h.b16 %v43
    %v236 = vunpack.c.l.b16 %v44
    %v237 = vunpack.c.h.b16 %v44
    %v238 = vunpack.c.l.b16 %v45
    %v239 = vunpack.c.h.b16 %v45
    %v240 = vunpack.c.l.b16 %v46
    %v241 = vunpack.c.h.b16 %v46
    %v242 = vunpack.c.l.b16 %v47
    %v243 = vunpack.c.h.b16 %v47
    %v244 = vunpack.c.l.b16 %v48
    %v245 = vunpack.c.h.b16 %v48
    %v246 = vunpack.c.l.b16 %v49
    %v247 = vunpack.c.h.b16 %v49
    %v248 = vunpack.c.l.b16 %v50
    %v249 = vunpack.c.h.b16 %v50
    %v250 = vunpack.c.l.b16 %v51
    %v251 = vunpack.c.h.b16 %v51
    %v252 = vunpack.c.l.b16 %v52
    %v253 = vunpack.c.h.b16 %v52
    %v254 = vunpack.c.l.b16 %v53
    %v255 = vunpack.c.h.b16 %v53
    %v256 = vunpack.c.l.b16 %v54
    %v257 = vunpack.c.h.b16 %v54
    %v258 = vunpack.c.l.b16 %v55
    %v259 = vunpack.c.h.b16 %v55
    %v260 = vunpack.c.l.b16 %v56
    %v261 = vunpack.c.h.b16 %v56
    %v262 = vunpack.c.l.b16 %v57
    %v263 = vunpack.c.h.b16 %v57
    %v264 = vunpack.c.l.b16 %v58
    %v265 = vunpack.c.h.b16 %v58
    %v266 = vunpack.c.l.b16 %v59
    %v267 = vunpack.c.h.b16 %v59
    %v268 = vunpack.c.l.b16 %v60
    %v269 = vunpack.c.h.b16 %v60
    %v270 = vunpack.c.l.b16 %v61
    %v271 = vunpack.c.h.b16 %v61
    %v272 = vunpack.c.l.b16 %v62
    %v273 = vunpack.c.h.b16 %v62
    %v274 = vunpack.c.l.b16 %v63
    %v275 = vunpack.c.h.b16 %v63
    %v276 = vunpack.c.l.b16 %v64
    %v277 = vunpack.c.h.b16 %v64
    %v278 = vunpack.c.l.b16 %v65
    %v279 = vunpack.c.h.b16 %v65
    %v280 = vunpack.c.l.b16 %v66
    %v281 = vunpack.c.h.b16 %v66
    %v282 = vunpack.c.l.b16 %v67
    %v283 = vunpack.c.h.b16 %v67
    %v284 = vunpack.c.l.b16 %v68
    %v285 = vunpack.c.h.b16 %v68
    %v286 = vunpack.c.l.b16 %v69
    %v287 = vunpack.c.h.b16 %v69
    %v288 = vunpack.c.l.b16 %v70
    %v289 = vunpack.c.h.b16 %v70
    %v290 = vunpack.c.l.b16 %v71
    %v291 = vunpack.c.h.b16 %v71
    %v292 = vunpack.c.l.b16 %v72
    %v293 = vunpack.c.h.b16 %v72
    %v294 = vunpack.c.l.b16 %v73
    %v295 = vunpack.c.h.b16 %v73
    %v296 = vunpack.c.l.b16 %v74
    %v297 = vunpack.c.h.b16 %v74
    %v298 = vunpack.c.l.b16 %v75
    %v299 = vunpack.c.h.b16 %v75
    %v300 = vunpack.c.l.b16 %v76
    %v301 = vunpack.c.h.b16 %v76
    %v302 = vunpack.c.l.b16 %v77
    %v303 = vunpack.c.h.b16 %v77
    %v304 = vunpack.c.l.b16 %v78
    %v305 = vunpack.c.h.b16 %v78
    %v306 = vunpack.c.l.b16 %v79
    %v307 = vunpack.c.h.b16 %v79
    %v308 = vunpack.c.l.b16 %v80
    %v309 = vunpack.c.h.b16 %v80
    %v310 = vunpack.c.l.b16 %v81
    %v311 = vunpack.c.h.b16 %v81
    %v312 = vunpack.c.l.b16 %v82
    %v313 = vunpack.c.h.b16 %v82
    %v314 = vunpack.c.l.b16 %v83
    %v315 = vunpack.c.h.b16 %v83
    %v316 = vunpack.c.l.b16 %v84
    %v317 = vunpack.c.h.b16 %v84
    %v318 = vunpack.c.l.b16 %v85
    %v319 = vunpack.c.h.b16 %v85
    %v320 = vunpack.c.l.b16 %v86
    %v321 = vunpack.c.h.b16 %v86
    %v322 = vunpack.c.l.b16 %v87
    %v323 = vunpack.c.h.b16 %v87
    %v324 = vunpack.c.l.b16 %v88
    %v325 = vunpack.c.h.b16 %v88
    %v326 = vunpack.c.l.b16 %v89
    %v327 = vunpack.c.h.b16 %v89
    %v328 = vunpack.c.l.b16 %v90
    %v329 = vunpack.c.h.b16 %v90
    %v330 = vunpack.c.l.b16 %v91
    %v331 = vunpack.c.h.b16 %v91
    %v332 = vunpack.c.l.b16 %v92
    %v333 = vunpack.c.h.b16 %v92
    %v334 = vunpack.c.l.b16 %v93
    %v335 = vunpack.c.h.b16 %v93
    %v336 = vunpack.c.l.b16 %v94
    %v337 = vunpack.c.h.b16 %v94
    %v338 = vunpack.c.l.b16 %v95
    %v339 = vunpack.c.h.b16 %v95
    %v340 = vunpack.c.l.b16 %v96
    %v341 = vunpack.c.h.b16 %v96
    %v342 = vunpack.c.l.b16 %v97
    %v343 = vunpack.c.h.b16 %v97
    %v344 = vunpack.c.l.b16 %v98
    %v345 = vunpack.c.h.b16 %v98
    %v346 = vunpack.c.l.b16 %v99
    %v347 = vunpack.c.h.b16 %v99
    %v348 = vpack.c.b16 %v210, %v204
    %v349 = vpack.c.b16 %v211, %v205
    %v350 = vpack.c.b16 %v212, %v206
    %v351 = vpack.c.b16 %v213, %v207
    %v352 = vpack.c.b16 %v214, %v208
    %v353 = vpack.c.b16 %v215, %v209
    %v354 = vpack.c.b16 %v222, %v216
    %v355 = vpack.c.b16 %v223, %v217
    %v356 = vpack.c.b16 %v224, %v218
    %v357 = vpack.c.b16 %v225, %v219
    %v358 = vpack.c.b16 %v226, %v220
    %v359 = vpack.c.b16 %v227, %v221
    %v360 = vpack.c.b16 %v234, %v228
    %v361 = vpack.c.b16 %v235, %v229
    %v362 = vpack.c.b16 %v236, %v230
    %v363 = vpack.c.b16 %v237, %v231
    %v364 = vpack.c.b16 %v238, %v232
    %v365 = vpack.c.b16 %v239, %v233
    %v366 = vpack.c.b16 %v246, %v240
    %v367 = vpack.c.b16 %v247, %v241
    %v368 = vpack.c.b16 %v248, %v242
    %v369 = vpack.c.b16 %v249, %v243
    %v370 = vpack.c.b16 %v250, %v244
    %v371 = vpack.c.b16 %v251, %v245
    %v372 = vpack.c.b16 %v258, %v252
    %v373 = vpack.c.b16 %v259, %v253
    %v374 = vpack.c.b16 %v260, %v254
    %v375 = vpack.c.b16 %v261, %v255
    %v376 = vpack.c.b16 %v262, %v256
    %v377 = vpack.c.b16 %v263, %v257
    %v378 = vpack.c.b16 %v270, %v264
    %v379 = vpack.c.b16 %v271, %v265
    %v380 = vpack.c.b16 %v272, %v266
    %v381 = vpack.c.b16 %v273, %v267
    %v382 = vpack.c.b16 %v274, %v268
    %v383 = vpack.c.b16 %v275, %v269
    %v384 = vpack.c.b16 %v282, %v276
    %v385 = vpack.c.b16 %v283, %v277
    %v386 = vpack.c.b16 %v284, %v278
    %v387 = vpack.c.b16 %v285, %v279
    %v388 = vpack.c.b16 %v286, %v280
    %v389 = vpack.c.b16 %v287, %v281
    %v390 = vpack.c.b16 %v294, %v288
    %v391 = vpack.c.b16 %v295, %v289
    %v392 = vpack.c.b16 %v296, %v290
    %v393 = vpack.c.b16 %v297, %v291
    %v394 = vpack.c.b16 %v298, %v292
    %v395 = vpack.c.b16 %v299, %v293
    %v396 = vpack.c.b16 %v306, %v300
    %v397 = vpack.c.b16 %v307, %v301
    %v398 = vpack.c.b16 %v308, %v302
    %v399 = vpack.c.b16 %v309, %v303
    %v400 = vpack.c.b16 %v310, %v304
    %v401 = vpack.c.b16 %v311, %v305
    %v402 = vpack.c.b16 %v318, %v312
    %v403 = vpack.c.b16 %v319, %v313
    %v404 = vpack.c.b16 %v320, %v314
    %v405 = vpack.c.b16 %v321, %v315
    %v406 = vpack.c.b16 %v322, %v316
    %v407 = vpack.c.b16 %v323, %v317
    %v408 = vpack.c.b16 %v330, %v324
    %v409 = vpack.c.b16 %v331, %v325
    %v410 = vpack.c.b16 %v332, %v326
    %v411 = vpack.c.b16 %v333, %v327
    %v412 = vpack.c.b16 %v334, %v328
    %v413 = vpack.c.b16 %v335, %v329
    %v414 = vpack.c.b16 %v342, %v336
    %v415 = vpack.c.b16 %v343, %v337
    %v416 = vpack.c.b16 %v344, %v338
    %v417 = vpack.c.b16 %v345, %v339
    %v418 = vpack.c.b16 %v346, %v340
    %v419 = vpack.c.b16 %v347, %v341
    %vm492 = vcmask 523264
    %v494 = vsel %vm492, %v27, 0
    %496 = vmatprep.subr.bf16.mxu0 %v349
    %497 = vmatpush1.bf16.msra.mxu0 %v348
    %498 = vmatprep.subr.bf16.mxu0 %v355
    %499 = vmatpush1.bf16.msra.mxu0 %v354
    %500 = vmatprep.subr.bf16.mxu0 %v361
    %501 = vmatpush1.bf16.msra.mxu0 %v360
    %502 = vmatprep.subr.bf16.mxu0 %v367
    %503 = vmatpush1.bf16.msra.mxu0 %v366
    %504 = vmatprep.subr.bf16.mxu0 %v373
    %505 = vmatpush1.bf16.msra.mxu0 %v372
    %506 = vmatprep.subr.bf16.mxu0 %v379
    %507 = vmatpush1.bf16.msra.mxu0 %v378
    %508 = vmatprep.subr.bf16.mxu0 %v385
    %509 = vmatpush1.bf16.msra.mxu0 %v384
    %510 = vmatprep.subr.bf16.mxu0 %v391
    %511 = vmatpush1.bf16.msra.mxu0 %v390
    %512 = vmatprep.subr.bf16.mxu0 %v397
    %513 = vmatpush1.bf16.msra.mxu0 %v396
    %514 = vmatprep.subr.bf16.mxu0 %v403
    %515 = vmatpush1.bf16.msra.mxu0 %v402
    %516 = vmatprep.subr.bf16.mxu0 %v409
    %517 = vmatpush1.bf16.msra.mxu0 %v408
    %518 = vmatprep.subr.bf16.mxu0 %v415
    %519 = vmatpush1.bf16.msra.mxu0 %v414
    %520 = vmatprep.subr.bf16.mxu0 0
    %521 = vmatpush1.bf16.msra.mxu0 0
    %522 = vmatprep.subr.bf16.mxu0 0
    %523 = vmatpush1.bf16.msra.mxu0 0
    %524 = vmatprep.subr.bf16.mxu0 0
    %525 = vmatpush1.bf16.msra.mxu0 0
    %526 = vmatprep.subr.bf16.mxu0 0
    %527 = vmatpush1.bf16.msra.mxu0 0
    %528 = vmatprep.mubr.bf16.mxu0 %v494
    %529 = vmatmul.mubr.bf16.gmra.mrb[0].mxu0 %v26
    %v530 = vpop.f32.mrb[0].mxu0
    %v531 = vadd.f32 %v105, %v530
    %v532 = vpop.f32.mrb[0].mxu0
    %v533 = vadd.f32 %v109, %v532
    %v534 = vpop.f32.mrb[0].mxu0
    %v535 = vadd.f32 %v105, %v534
    %v536 = vpop.f32.mrb[0].mxu0
    %v537 = vadd.f32 %v109, %v536
    %538 = vdwg.mxu0
    %539 = vmatprep.subr.bf16.mxu0 %v351
    %540 = vmatpush1.bf16.msra.mxu0 %v350
    %541 = vmatprep.subr.bf16.mxu0 %v357
    %542 = vmatpush1.bf16.msra.mxu0 %v356
    %543 = vmatprep.subr.bf16.mxu0 %v363
    %544 = vmatpush1.bf16.msra.mxu0 %v362
    %545 = vmatprep.subr.bf16.mxu0 %v369
    %546 = vmatpush1.bf16.msra.mxu0 %v368
    %547 = vmatprep.subr.bf16.mxu0 %v375
    %548 = vmatpush1.bf16.msra.mxu0 %v374
    %549 = vmatprep.subr.bf16.mxu0 %v381
    %550 = vmatpush1.bf16.msra.mxu0 %v380
    %551 = vmatprep.subr.bf16.mxu0 %v387
    %552 = vmatpush1.bf16.msra.mxu0 %v386
    %553 = vmatprep.subr.bf16.mxu0 %v393
    %554 = vmatpush1.bf16.msra.mxu0 %v392
    %555 = vmatprep.subr.bf16.mxu0 %v399
    %556 = vmatpush1.bf16.msra.mxu0 %v398
    %557 = vmatprep.subr.bf16.mxu0 %v405
    %558 = vmatpush1.bf16.msra.mxu0 %v404
    %559 = vmatprep.subr.bf16.mxu0 %v411
    %560 = vmatpush1.bf16.msra.mxu0 %v410
    %561 = vmatprep.subr.bf16.mxu0 %v417
    %562 = vmatpush1.bf16.msra.mxu0 %v416
    %563 = vmatprep.subr.bf16.mxu0 0
    %564 = vmatpush1.bf16.msra.mxu0 0
    %565 = vmatprep.subr.bf16.mxu0 0
    %566 = vmatpush1.bf16.msra.mxu0 0
    %567 = vmatprep.subr.bf16.mxu0 0
    %568 = vmatpush1.bf16.msra.mxu0 0
    %569 = vmatprep.subr.bf16.mxu0 0
    %570 = vmatpush1.bf16.msra.mxu0 0
    %571 = vmatprep.mubr.bf16.mxu0 %v494
    %572 = vmatmul.mubr.bf16.gmra.mrb[0].mxu0 %v26
    %v573 = vpop.f32.mrb[0].mxu0
    %v574 = vadd.f32 %v113, %v573
    %v575 = vpop.f32.mrb[0].mxu0
    %v576 = vadd.f32 %v117, %v575
    %v577 = vpop.f32.mrb[0].mxu0
    %v578 = vadd.f32 %v113, %v577
    %v579 = vpop.f32.mrb[0].mxu0
    %v580 = vadd.f32 %v117, %v579
    %581 = vdwg.mxu0
    %582 = vmatprep.subr.bf16.mxu0 %v353
    %583 = vmatpush1.bf16.msra.mxu0 %v352
    %584 = vmatprep.subr.bf16.mxu0 %v359
    %585 = vmatpush1.bf16.msra.mxu0 %v358
    %586 = vmatprep.subr.bf16.mxu0 %v365
    %587 = vmatpush1.bf16.msra.mxu0 %v364
    %588 = vmatprep.subr.bf16.mxu0 %v371
    %589 = vmatpush1.bf16.msra.mxu0 %v370
    %590 = vmatprep.subr.bf16.mxu0 %v377
    %591 = vmatpush1.bf16.msra.mxu0 %v376
    %592 = vmatprep.subr.bf16.mxu0 %v383
    %593 = vmatpush1.bf16.msra.mxu0 %v382
    %594 = vmatprep.subr.bf16.mxu0 %v389
    %595 = vmatpush1.bf16.msra.mxu0 %v388
    %596 = vmatprep.subr.bf16.mxu0 %v395
    %597 = vmatpush1.bf16.msra.mxu0 %v394
    %598 = vmatprep.subr.bf16.mxu0 %v401
    %599 = vmatpush1.bf16.msra.mxu0 %v400
    %600 = vmatprep.subr.bf16.mxu0 %v407
    %601 = vmatpush1.bf16.msra.mxu0 %v406
    %602 = vmatprep.subr.bf16.mxu0 %v413
    %603 = vmatpush1.bf16.msra.mxu0 %v412
    %604 = vmatprep.subr.bf16.mxu0 %v419
    %605 = vmatpush1.bf16.msra.mxu0 %v418
    %606 = vmatprep.subr.bf16.mxu0 0
    %607 = vmatpush1.bf16.msra.mxu0 0
    %608 = vmatprep.subr.bf16.mxu0 0
    %609 = vmatpush1.bf16.msra.mxu0 0
    %610 = vmatprep.subr.bf16.mxu0 0
    %611 = vmatpush1.bf16.msra.mxu0 0
    %612 = vmatprep.subr.bf16.mxu0 0
    %613 = vmatpush1.bf16.msra.mxu0 0
    %614 = vmatprep.mubr.bf16.mxu0 %v494
    %615 = vmatmul.mubr.bf16.gmra.mrb[0].mxu0 %v26
    %v616 = vpop.f32.mrb[0].mxu0
    %v617 = vadd.f32 %v121, %v616
    %v618 = vpop.f32.mrb[0].mxu0
    %v619 = vadd.f32 %v125, %v618
    %v620 = vpop.f32.mrb[0].mxu0
    %v621 = vadd.f32 %v121, %v620
    %v622 = vpop.f32.mrb[0].mxu0
    %v623 = vadd.f32 %v125, %v622
    %624 = vdwg.mxu0
    %v625 = vmul.f32 %v531, 0.5
    %v626 = vmul.f32 %v533, 0.5
    %v627 = vmul.f32 %v574, 0.5
    %v628 = vmul.f32 %v576, 0.5
    %v629 = vmul.f32 %v617, 0.5
    %v630 = vmul.f32 %v619, 0.5
    %v631 = vmul.f32 %v535, 0.5
    %v632 = vmul.f32 %v537, 0.5
    %v633 = vmul.f32 %v578, 0.5
    %v634 = vmul.f32 %v580, 0.5
    %v635 = vmul.f32 %v621, 0.5
    %v636 = vmul.f32 %v623, 0.5
    %v637 = vmul.f32 %v531, 0.70710677
    %v638 = vmul.f32 %v533, 0.70710677
    %v639 = vmul.f32 %v574, 0.70710677
    %v640 = vmul.f32 %v576, 0.70710677
    %v641 = vmul.f32 %v617, 0.70710677
    %v642 = vmul.f32 %v619, 0.70710677
    %v643 = vmul.f32 %v535, 0.70710677
    %v644 = vmul.f32 %v537, 0.70710677
    %v645 = vmul.f32 %v578, 0.70710677
    %v646 = vmul.f32 %v580, 0.70710677
    %v647 = vmul.f32 %v621, 0.70710677
    %v648 = vmul.f32 %v623, 0.70710677
    %v649 = verf.f32.pop %v637
    %v650 = verf.f32.pop %v638
    %v651 = verf.f32.pop %v639
    %v652 = verf.f32.pop %v640
    %v653 = verf.f32.pop %v641
    %v654 = verf.f32.pop %v642
    %v655 = verf.f32.pop %v643
    %v656 = verf.f32.pop %v644
    %v657 = verf.f32.pop %v645
    %v658 = verf.f32.pop %v646
    %v659 = verf.f32.pop %v647
    %v660 = verf.f32.pop %v648
    %v661 = vadd.f32 %v649, 1.0
    %v662 = vadd.f32 %v650, 1.0
    %v663 = vadd.f32 %v651, 1.0
    %v664 = vadd.f32 %v652, 1.0
    %v665 = vadd.f32 %v653, 1.0
    %v666 = vadd.f32 %v654, 1.0
    %v667 = vadd.f32 %v655, 1.0
    %v668 = vadd.f32 %v656, 1.0
    %v669 = vadd.f32 %v657, 1.0
    %v670 = vadd.f32 %v658, 1.0
    %v671 = vadd.f32 %v659, 1.0
    %v672 = vadd.f32 %v660, 1.0
    %v673 = vmul.f32 %v625, %v661
    %v674 = vmul.f32 %v626, %v662
    %v675 = vmul.f32 %v627, %v663
    %v676 = vmul.f32 %v628, %v664
    %v677 = vmul.f32 %v629, %v665
    %v678 = vmul.f32 %v630, %v666
    %v679 = vmul.f32 %v631, %v667
    %v680 = vmul.f32 %v632, %v668
    %v681 = vmul.f32 %v633, %v669
    %v682 = vmul.f32 %v634, %v670
    %v683 = vmul.f32 %v635, %v671
    %v684 = vmul.f32 %v636, %v672
    %v685 = vpack.c.bf16 %v679, %v673
    %v686 = vpack.c.bf16 %v680, %v674
    %v687 = vpack.c.bf16 %v681, %v675
    %v688 = vpack.c.bf16 %v682, %v676
    %v689 = vpack.c.bf16 %v683, %v677
    %v690 = vpack.c.bf16 %v684, %v678
    %v691 = vld [vmem:[%s3] sm:$0xff]
    %v692 = vld [vmem:[%s3 + $0x8] sm:$0xff]
    %v693 = vld [vmem:[%s3 + $0x10] sm:$0xff]
    %v694 = vld [vmem:[%s3 + $0x18] sm:$0xff]
    %v695 = vld [vmem:[%s3 + $0x20] sm:$0xff]
    %v696 = vld [vmem:[%s3 + $0x28] sm:$0xff]
    %v697 = vld [vmem:[%s3 + $0x30] sm:$0xff]
    %v698 = vld [vmem:[%s3 + $0x38] sm:$0xff]
    %v699 = vld [vmem:[%s3 + $0x40] sm:$0xff]
    %v700 = vld [vmem:[%s3 + $0x48] sm:$0xff]
    %v701 = vld [vmem:[%s3 + $0x50] sm:$0xff]
    %v702 = vld [vmem:[%s3 + $0x58] sm:$0xff]
    %v703 = vld [vmem:[%s3 + $0x60] sm:$0xff]
    %v704 = vld [vmem:[%s3 + $0x68] sm:$0xff]
    %v705 = vld [vmem:[%s3 + $0x70] sm:$0xff]
    %v706 = vld [vmem:[%s3 + $0x78] sm:$0xff]
    %v707 = vld [vmem:[%s3 + $0x80] sm:$0xff]
    %v708 = vld [vmem:[%s3 + $0x88] sm:$0xff]
    %v709 = vld [vmem:[%s3 + $0x90] sm:$0xff]
    %v710 = vld [vmem:[%s3 + $0x98] sm:$0xff]
    %v711 = vld [vmem:[%s3 + $0xa0] sm:$0xff]
    %v712 = vld [vmem:[%s3 + $0xa8] sm:$0xff]
    %v713 = vld [vmem:[%s3 + $0xb0] sm:$0xff]
    %v714 = vld [vmem:[%s3 + $0xb8] sm:$0xff]
    %v715 = vld [vmem:[%s3 + $0xc0] sm:$0xff]
    %v716 = vld [vmem:[%s3 + $0xc8] sm:$0xff]
    %v717 = vld [vmem:[%s3 + $0xd0] sm:$0xff]
    %v718 = vld [vmem:[%s3 + $0xd8] sm:$0xff]
    %v719 = vld [vmem:[%s3 + $0xe0] sm:$0xff]
    %v720 = vld [vmem:[%s3 + $0xe8] sm:$0xff]
    %v721 = vld [vmem:[%s3 + $0xf0] sm:$0xff]
    %v722 = vld [vmem:[%s3 + $0xf8] sm:$0xff]
    %v723 = vld [vmem:[%s3 + $0x100] sm:$0xff]
    %v724 = vld [vmem:[%s3 + $0x108] sm:$0xff]
    %v725 = vld [vmem:[%s3 + $0x110] sm:$0xff]
    %v726 = vld [vmem:[%s3 + $0x118] sm:$0xff]
    %v727 = vld [vmem:[%s3 + $0x120] sm:$0xff]
    %v728 = vld [vmem:[%s3 + $0x128] sm:$0xff]
    %v729 = vld [vmem:[%s3 + $0x130] sm:$0xff]
    %v730 = vld [vmem:[%s3 + $0x138] sm:$0xff]
    %v731 = vld [vmem:[%s3 + $0x140] sm:$0xff]
    %v732 = vld [vmem:[%s3 + $0x148] sm:$0xff]
    %v733 = vld [vmem:[%s3 + $0x150] sm:$0xff]
    %v734 = vld [vmem:[%s3 + $0x158] sm:$0xff]
    %v735 = vld [vmem:[%s3 + $0x160] sm:$0xff]
    %v736 = vld [vmem:[%s3 + $0x168] sm:$0xff]
    %v737 = vld [vmem:[%s3 + $0x170] sm:$0xff]
    %v738 = vld [vmem:[%s3 + $0x178] sm:$0xff]
    %v739 = vld [vmem:[%s3 + $0x180] sm:$0xff]
    %v740 = vld [vmem:[%s3 + $0x188] sm:$0xff]
    %v741 = vld [vmem:[%s3 + $0x190] sm:$0xff]
    %v742 = vld [vmem:[%s3 + $0x198] sm:$0xff]
    %v743 = vld [vmem:[%s3 + $0x1a0] sm:$0xff]
    %v744 = vld [vmem:[%s3 + $0x1a8] sm:$0xff]
    %v745 = vld [vmem:[%s3 + $0x1b0] sm:$0xff]
    %v746 = vld [vmem:[%s3 + $0x1b8] sm:$0xff]
    %v747 = vld [vmem:[%s3 + $0x1c0] sm:$0xff]
    %v748 = vld [vmem:[%s3 + $0x1c8] sm:$0xff]
    %v749 = vld [vmem:[%s3 + $0x1d0] sm:$0xff]
    %v750 = vld [vmem:[%s3 + $0x1d8] sm:$0xff]
    %v751 = vld [vmem:[%s3 + $0x1e0] sm:$0xff]
    %v752 = vld [vmem:[%s3 + $0x1e8] sm:$0xff]
    %v753 = vld [vmem:[%s3 + $0x1f0] sm:$0xff]
    %v754 = vld [vmem:[%s3 + $0x1f8] sm:$0xff]
    %v755 = vld [vmem:[%s3 + $0x200] sm:$0xff]
    %v756 = vld [vmem:[%s3 + $0x208] sm:$0xff]
    %v757 = vld [vmem:[%s3 + $0x210] sm:$0xff]
    %v758 = vld [vmem:[%s3 + $0x218] sm:$0xff]
    %v759 = vld [vmem:[%s3 + $0x220] sm:$0xff]
    %v760 = vld [vmem:[%s3 + $0x228] sm:$0xff]
    %v761 = vld [vmem:[%s3 + $0x230] sm:$0xff]
    %v762 = vld [vmem:[%s3 + $0x238] sm:$0xff]
    %v763 = vld [vmem:[%s3 + $0x240] sm:$0xff]
    %v764 = vld [vmem:[%s3 + $0x248] sm:$0xff]
    %v765 = vld [vmem:[%s3 + $0x250] sm:$0xff]
    %v766 = vld [vmem:[%s3 + $0x258] sm:$0xff]
    %v767 = vld [vmem:[%s3 + $0x260] sm:$0xff]
    %v768 = vld [vmem:[%s3 + $0x268] sm:$0xff]
    %v769 = vld [vmem:[%s3 + $0x270] sm:$0xff]
    %v770 = vld [vmem:[%s3 + $0x278] sm:$0xff]
    %v771 = vld [vmem:[%s3 + $0x280] sm:$0xff]
    %v772 = vld [vmem:[%s3 + $0x288] sm:$0xff]
    %v773 = vld [vmem:[%s3 + $0x290] sm:$0xff]
    %v774 = vld [vmem:[%s3 + $0x298] sm:$0xff]
    %v775 = vld [vmem:[%s3 + $0x2a0] sm:$0xff]
    %v776 = vld [vmem:[%s3 + $0x2a8] sm:$0xff]
    %v777 = vld [vmem:[%s3 + $0x2b0] sm:$0xff]
    %v778 = vld [vmem:[%s3 + $0x2b8] sm:$0xff]
    %v779 = vld [vmem:[%s3 + $0x2c0] sm:$0xff]
    %v780 = vld [vmem:[%s3 + $0x2c8] sm:$0xff]
    %v781 = vld [vmem:[%s3 + $0x2d0] sm:$0xff]
    %v782 = vld [vmem:[%s3 + $0x2d8] sm:$0xff]
    %v783 = vld [vmem:[%s3 + $0x2e0] sm:$0xff]
    %v784 = vld [vmem:[%s3 + $0x2e8] sm:$0xff]
    %v785 = vld [vmem:[%s3 + $0x2f0] sm:$0xff]
    %v786 = vld [vmem:[%s3 + $0x2f8] sm:$0xff]
    %v787 = vld [vmem:[%s4] sm:$0x3]
    %v789 = vlaneseq
    %v790 = vshrl.u32 %v789, 7
    %v791 = vsub.s32 0, %v790
    %v792 = vrot.slane %v787, %v791
    %v793 = vlaneseq
    %v794 = vshrl.u32 %v793, 7
    %v795 = vsub.s32 1, %v794
    %v796 = vrot.slane %v787, %v795
    %v895 = vunpack.c.l.b16 %v691
    %v896 = vunpack.c.h.b16 %v691
    %v897 = vunpack.c.l.b16 %v692
    %v898 = vunpack.c.h.b16 %v692
    %v899 = vunpack.c.l.b16 %v693
    %v900 = vunpack.c.h.b16 %v693
    %v901 = vunpack.c.l.b16 %v694
    %v902 = vunpack.c.h.b16 %v694
    %v903 = vunpack.c.l.b16 %v695
    %v904 = vunpack.c.h.b16 %v695
    %v905 = vunpack.c.l.b16 %v696
    %v906 = vunpack.c.h.b16 %v696
    %v907 = vunpack.c.l.b16 %v697
    %v908 = vunpack.c.h.b16 %v697
    %v909 = vunpack.c.l.b16 %v698
    %v910 = vunpack.c.h.b16 %v698
    %v911 = vunpack.c.l.b16 %v699
    %v912 = vunpack.c.h.b16 %v699
    %v913 = vunpack.c.l.b16 %v700
    %v914 = vunpack.c.h.b16 %v700
    %v915 = vunpack.c.l.b16 %v701
    %v916 = vunpack.c.h.b16 %v701
    %v917 = vunpack.c.l.b16 %v702
    %v918 = vunpack.c.h.b16 %v702
    %v919 = vunpack.c.l.b16 %v703
    %v920 = vunpack.c.h.b16 %v703
    %v921 = vunpack.c.l.b16 %v704
    %v922 = vunpack.c.h.b16 %v704
    %v923 = vunpack.c.l.b16 %v705
    %v924 = vunpack.c.h.b16 %v705
    %v925 = vunpack.c.l.b16 %v706
    %v926 = vunpack.c.h.b16 %v706
    %v927 = vunpack.c.l.b16 %v707
    %v928 = vunpack.c.h.b16 %v707
    %v929 = vunpack.c.l.b16 %v708
    %v930 = vunpack.c.h.b16 %v708
    %v931 = vunpack.c.l.b16 %v709
    %v932 = vunpack.c.h.b16 %v709
    %v933 = vunpack.c.l.b16 %v710
    %v934 = vunpack.c.h.b16 %v710
    %v935 = vunpack.c.l.b16 %v711
    %v936 = vunpack.c.h.b16 %v711
    %v937 = vunpack.c.l.b16 %v712
    %v938 = vunpack.c.h.b16 %v712
    %v939 = vunpack.c.l.b16 %v713
    %v940 = vunpack.c.h.b16 %v713
    %v941 = vunpack.c.l.b16 %v714
    %v942 = vunpack.c.h.b16 %v714
    %v943 = vunpack.c.l.b16 %v715
    %v944 = vunpack.c.h.b16 %v715
    %v945 = vunpack.c.l.b16 %v716
    %v946 = vunpack.c.h.b16 %v716
    %v947 = vunpack.c.l.b16 %v717
    %v948 = vunpack.c.h.b16 %v717
    %v949 = vunpack.c.l.b16 %v718
    %v950 = vunpack.c.h.b16 %v718
    %v951 = vunpack.c.l.b16 %v719
    %v952 = vunpack.c.h.b16 %v719
    %v953 = vunpack.c.l.b16 %v720
    %v954 = vunpack.c.h.b16 %v720
    %v955 = vunpack.c.l.b16 %v721
    %v956 = vunpack.c.h.b16 %v721
    %v957 = vunpack.c.l.b16 %v722
    %v958 = vunpack.c.h.b16 %v722
    %v959 = vunpack.c.l.b16 %v723
    %v960 = vunpack.c.h.b16 %v723
    %v961 = vunpack.c.l.b16 %v724
    %v962 = vunpack.c.h.b16 %v724
    %v963 = vunpack.c.l.b16 %v725
    %v964 = vunpack.c.h.b16 %v725
    %v965 = vunpack.c.l.b16 %v726
    %v966 = vunpack.c.h.b16 %v726
    %v967 = vunpack.c.l.b16 %v727
    %v968 = vunpack.c.h.b16 %v727
    %v969 = vunpack.c.l.b16 %v728
    %v970 = vunpack.c.h.b16 %v728
    %v971 = vunpack.c.l.b16 %v729
    %v972 = vunpack.c.h.b16 %v729
    %v973 = vunpack.c.l.b16 %v730
    %v974 = vunpack.c.h.b16 %v730
    %v975 = vunpack.c.l.b16 %v731
    %v976 = vunpack.c.h.b16 %v731
    %v977 = vunpack.c.l.b16 %v732
    %v978 = vunpack.c.h.b16 %v732
    %v979 = vunpack.c.l.b16 %v733
    %v980 = vunpack.c.h.b16 %v733
    %v981 = vunpack.c.l.b16 %v734
    %v982 = vunpack.c.h.b16 %v734
    %v983 = vunpack.c.l.b16 %v735
    %v984 = vunpack.c.h.b16 %v735
    %v985 = vunpack.c.l.b16 %v736
    %v986 = vunpack.c.h.b16 %v736
    %v987 = vunpack.c.l.b16 %v737
    %v988 = vunpack.c.h.b16 %v737
    %v989 = vunpack.c.l.b16 %v738
    %v990 = vunpack.c.h.b16 %v738
    %v991 = vunpack.c.l.b16 %v739
    %v992 = vunpack.c.h.b16 %v739
    %v993 = vunpack.c.l.b16 %v740
    %v994 = vunpack.c.h.b16 %v740
    %v995 = vunpack.c.l.b16 %v741
    %v996 = vunpack.c.h.b16 %v741
    %v997 = vunpack.c.l.b16 %v742
    %v998 = vunpack.c.h.b16 %v742
    %v999 = vunpack.c.l.b16 %v743
    %v1000 = vunpack.c.h.b16 %v743
    %v1001 = vunpack.c.l.b16 %v744
    %v1002 = vunpack.c.h.b16 %v744
    %v1003 = vunpack.c.l.b16 %v745
    %v1004 = vunpack.c.h.b16 %v745
    %v1005 = vunpack.c.l.b16 %v746
    %v1006 = vunpack.c.h.b16 %v746
    %v1007 = vunpack.c.l.b16 %v747
    %v1008 = vunpack.c.h.b16 %v747
    %v1009 = vunpack.c.l.b16 %v748
    %v1010 = vunpack.c.h.b16 %v748
    %v1011 = vunpack.c.l.b16 %v749
    %v1012 = vunpack.c.h.b16 %v749
    %v1013 = vunpack.c.l.b16 %v750
    %v1014 = vunpack.c.h.b16 %v750
    %v1015 = vunpack.c.l.b16 %v751
    %v1016 = vunpack.c.h.b16 %v751
    %v1017 = vunpack.c.l.b16 %v752
    %v1018 = vunpack.c.h.b16 %v752
    %v1019 = vunpack.c.l.b16 %v753
    %v1020 = vunpack.c.h.b16 %v753
    %v1021 = vunpack.c.l.b16 %v754
    %v1022 = vunpack.c.h.b16 %v754
    %v1023 = vunpack.c.l.b16 %v755
    %v1024 = vunpack.c.h.b16 %v755
    %v1025 = vunpack.c.l.b16 %v756
    %v1026 = vunpack.c.h.b16 %v756
    %v1027 = vunpack.c.l.b16 %v757
    %v1028 = vunpack.c.h.b16 %v757
    %v1029 = vunpack.c.l.b16 %v758
    %v1030 = vunpack.c.h.b16 %v758
    %v1031 = vunpack.c.l.b16 %v759
    %v1032 = vunpack.c.h.b16 %v759
    %v1033 = vunpack.c.l.b16 %v760
    %v1034 = vunpack.c.h.b16 %v760
    %v1035 = vunpack.c.l.b16 %v761
    %v1036 = vunpack.c.h.b16 %v761
    %v1037 = vunpack.c.l.b16 %v762
    %v1038 = vunpack.c.h.b16 %v762
    %v1039 = vunpack.c.l.b16 %v763
    %v1040 = vunpack.c.h.b16 %v763
    %v1041 = vunpack.c.l.b16 %v764
    %v1042 = vunpack.c.h.b16 %v764
    %v1043 = vunpack.c.l.b16 %v765
    %v1044 = vunpack.c.h.b16 %v765
    %v1045 = vunpack.c.l.b16 %v766
    %v1046 = vunpack.c.h.b16 %v766
    %v1047 = vunpack.c.l.b16 %v767
    %v1048 = vunpack.c.h.b16 %v767
    %v1049 = vunpack.c.l.b16 %v768
    %v1050 = vunpack.c.h.b16 %v768
    %v1051 = vunpack.c.l.b16 %v769
    %v1052 = vunpack.c.h.b16 %v769
    %v1053 = vunpack.c.l.b16 %v770
    %v1054 = vunpack.c.h.b16 %v770
    %v1055 = vunpack.c.l.b16 %v771
    %v1056 = vunpack.c.h.b16 %v771
    %v1057 = vunpack.c.l.b16 %v772
    %v1058 = vunpack.c.h.b16 %v772
    %v1059 = vunpack.c.l.b16 %v773
    %v1060 = vunpack.c.h.b16 %v773
    %v1061 = vunpack.c.l.b16 %v774
    %v1062 = vunpack.c.h.b16 %v774
    %v1063 = vunpack.c.l.b16 %v775
    %v1064 = vunpack.c.h.b16 %v775
    %v1065 = vunpack.c.l.b16 %v776
    %v1066 = vunpack.c.h.b16 %v776
    %v1067 = vunpack.c.l.b16 %v777
    %v1068 = vunpack.c.h.b16 %v777
    %v1069 = vunpack.c.l.b16 %v778
    %v1070 = vunpack.c.h.b16 %v778
    %v1071 = vunpack.c.l.b16 %v779
    %v1072 = vunpack.c.h.b16 %v779
    %v1073 = vunpack.c.l.b16 %v780
    %v1074 = vunpack.c.h.b16 %v780
    %v1075 = vunpack.c.l.b16 %v781
    %v1076 = vunpack.c.h.b16 %v781
    %v1077 = vunpack.c.l.b16 %v782
    %v1078 = vunpack.c.h.b16 %v782
    %v1079 = vunpack.c.l.b16 %v783
    %v1080 = vunpack.c.h.b16 %v783
    %v1081 = vunpack.c.l.b16 %v784
    %v1082 = vunpack.c.h.b16 %v784
    %v1083 = vunpack.c.l.b16 %v785
    %v1084 = vunpack.c.h.b16 %v785
    %v1085 = vunpack.c.l.b16 %v786
    %v1086 = vunpack.c.h.b16 %v786
    %v1087 = vpack.c.b16 %v897, %v895
    %v1088 = vpack.c.b16 %v898, %v896
    %v1089 = vpack.c.b16 %v901, %v899
    %v1090 = vpack.c.b16 %v902, %v900
    %v1091 = vpack.c.b16 %v905, %v903
    %v1092 = vpack.c.b16 %v906, %v904
    %v1093 = vpack.c.b16 %v909, %v907
    %v1094 = vpack.c.b16 %v910, %v908
    %v1095 = vpack.c.b16 %v913, %v911
    %v1096 = vpack.c.b16 %v914, %v912
    %v1097 = vpack.c.b16 %v917, %v915
    %v1098 = vpack.c.b16 %v918, %v916
    %v1099 = vpack.c.b16 %v921, %v919
    %v1100 = vpack.c.b16 %v922, %v920
    %v1101 = vpack.c.b16 %v925, %v923
    %v1102 = vpack.c.b16 %v926, %v924
    %v1103 = vpack.c.b16 %v929, %v927
    %v1104 = vpack.c.b16 %v930, %v928
    %v1105 = vpack.c.b16 %v933, %v931
    %v1106 = vpack.c.b16 %v934, %v932
    %v1107 = vpack.c.b16 %v937, %v935
    %v1108 = vpack.c.b16 %v938, %v936
    %v1109 = vpack.c.b16 %v941, %v939
    %v1110 = vpack.c.b16 %v942, %v940
    %v1111 = vpack.c.b16 %v945, %v943
    %v1112 = vpack.c.b16 %v946, %v944
    %v1113 = vpack.c.b16 %v949, %v947
    %v1114 = vpack.c.b16 %v950, %v948
    %v1115 = vpack.c.b16 %v953, %v951
    %v1116 = vpack.c.b16 %v954, %v952
    %v1117 = vpack.c.b16 %v957, %v955
    %v1118 = vpack.c.b16 %v958, %v956
    %v1119 = vpack.c.b16 %v961, %v959
    %v1120 = vpack.c.b16 %v962, %v960
    %v1121 = vpack.c.b16 %v965, %v963
    %v1122 = vpack.c.b16 %v966, %v964
    %v1123 = vpack.c.b16 %v969, %v967
    %v1124 = vpack.c.b16 %v970, %v968
    %v1125 = vpack.c.b16 %v973, %v971
    %v1126 = vpack.c.b16 %v974, %v972
    %v1127 = vpack.c.b16 %v977, %v975
    %v1128 = vpack.c.b16 %v978, %v976
    %v1129 = vpack.c.b16 %v981, %v979
    %v1130 = vpack.c.b16 %v982, %v980
    %v1131 = vpack.c.b16 %v985, %v983
    %v1132 = vpack.c.b16 %v986, %v984
    %v1133 = vpack.c.b16 %v989, %v987
    %v1134 = vpack.c.b16 %v990, %v988
    %v1135 = vpack.c.b16 %v993, %v991
    %v1136 = vpack.c.b16 %v994, %v992
    %v1137 = vpack.c.b16 %v997, %v995
    %v1138 = vpack.c.b16 %v998, %v996
    %v1139 = vpack.c.b16 %v1001, %v999
    %v1140 = vpack.c.b16 %v1002, %v1000
    %v1141 = vpack.c.b16 %v1005, %v1003
    %v1142 = vpack.c.b16 %v1006, %v1004
    %v1143 = vpack.c.b16 %v1009, %v1007
    %v1144 = vpack.c.b16 %v1010, %v1008
    %v1145 = vpack.c.b16 %v1013, %v1011
    %v1146 = vpack.c.b16 %v1014, %v1012
    %v1147 = vpack.c.b16 %v1017, %v1015
    %v1148 = vpack.c.b16 %v1018, %v1016
    %v1149 = vpack.c.b16 %v1021, %v1019
    %v1150 = vpack.c.b16 %v1022, %v1020
    %v1151 = vpack.c.b16 %v1025, %v1023
    %v1152 = vpack.c.b16 %v1026, %v1024
    %v1153 = vpack.c.b16 %v1029, %v1027
    %v1154 = vpack.c.b16 %v1030, %v1028
    %v1155 = vpack.c.b16 %v1033, %v1031
    %v1156 = vpack.c.b16 %v1034, %v1032
    %v1157 = vpack.c.b16 %v1037, %v1035
    %v1158 = vpack.c.b16 %v1038, %v1036
    %v1159 = vpack.c.b16 %v1041, %v1039
    %v1160 = vpack.c.b16 %v1042, %v1040
    %v1161 = vpack.c.b16 %v1045, %v1043
    %v1162 = vpack.c.b16 %v1046, %v1044
    %v1163 = vpack.c.b16 %v1049, %v1047
    %v1164 = vpack.c.b16 %v1050, %v1048
    %v1165 = vpack.c.b16 %v1053, %v1051
    %v1166 = vpack.c.b16 %v1054, %v1052
    %v1167 = vpack.c.b16 %v1057, %v1055
    %v1168 = vpack.c.b16 %v1058, %v1056
    %v1169 = vpack.c.b16 %v1061, %v1059
    %v1170 = vpack.c.b16 %v1062, %v1060
    %v1171 = vpack.c.b16 %v1065, %v1063
    %v1172 = vpack.c.b16 %v1066, %v1064
    %v1173 = vpack.c.b16 %v1069, %v1067
    %v1174 = vpack.c.b16 %v1070, %v1068
    %v1175 = vpack.c.b16 %v1073, %v1071
    %v1176 = vpack.c.b16 %v1074, %v1072
    %v1177 = vpack.c.b16 %v1077, %v1075
    %v1178 = vpack.c.b16 %v1078, %v1076
    %v1179 = vpack.c.b16 %v1081, %v1079
    %v1180 = vpack.c.b16 %v1082, %v1080
    %v1181 = vpack.c.b16 %v1085, %v1083
    %v1182 = vpack.c.b16 %v1086, %v1084
    %1279 = vmatprep.subr.bf16.mxu0 %v1088
    %1280 = vmatpush1.bf16.msra.mxu0 %v1087
    %1281 = vmatprep.subr.bf16.mxu0 %v1090
    %1282 = vmatpush1.bf16.msra.mxu0 %v1089
    %1283 = vmatprep.subr.bf16.mxu0 %v1092
    %1284 = vmatpush1.bf16.msra.mxu0 %v1091
    %1285 = vmatprep.subr.bf16.mxu0 %v1094
    %1286 = vmatpush1.bf16.msra.mxu0 %v1093
    %1287 = vmatprep.subr.bf16.mxu0 %v1096
    %1288 = vmatpush1.bf16.msra.mxu0 %v1095
    %1289 = vmatprep.subr.bf16.mxu0 %v1098
    %1290 = vmatpush1.bf16.msra.mxu0 %v1097
    %1291 = vmatprep.subr.bf16.mxu0 %v1100
    %1292 = vmatpush1.bf16.msra.mxu0 %v1099
    %1293 = vmatprep.subr.bf16.mxu0 %v1102
    %1294 = vmatpush1.bf16.msra.mxu0 %v1101
    %1295 = vmatprep.subr.bf16.mxu0 %v1104
    %1296 = vmatpush1.bf16.msra.mxu0 %v1103
    %1297 = vmatprep.subr.bf16.mxu0 %v1106
    %1298 = vmatpush1.bf16.msra.mxu0 %v1105
    %1299 = vmatprep.subr.bf16.mxu0 %v1108
    %1300 = vmatpush1.bf16.msra.mxu0 %v1107
    %1301 = vmatprep.subr.bf16.mxu0 %v1110
    %1302 = vmatpush1.bf16.msra.mxu0 %v1109
    %1303 = vmatprep.subr.bf16.mxu0 %v1112
    %1304 = vmatpush1.bf16.msra.mxu0 %v1111
    %1305 = vmatprep.subr.bf16.mxu0 %v1114
    %1306 = vmatpush1.bf16.msra.mxu0 %v1113
    %1307 = vmatprep.subr.bf16.mxu0 %v1116
    %1308 = vmatpush1.bf16.msra.mxu0 %v1115
    %1309 = vmatprep.subr.bf16.mxu0 %v1118
    %1310 = vmatpush1.bf16.msra.mxu0 %v1117
    %1311 = vmatprep.mubr.bf16.mxu0 %v686
    %1312 = vmatmul.mubr.bf16.gmra.mrb[0].mxu0 %v685
    %v1313 = vpop.f32.mrb[0].mxu0
    %v1314 = vadd.f32 %v792, %v1313
    %v1315 = vpop.f32.mrb[0].mxu0
    %v1316 = vadd.f32 %v796, %v1315
    %v1317 = vpop.f32.mrb[0].mxu0
    %v1318 = vadd.f32 %v792, %v1317
    %v1319 = vpop.f32.mrb[0].mxu0
    %v1320 = vadd.f32 %v796, %v1319
    %1321 = vdwg.mxu0
    %1322 = vmatprep.subr.bf16.mxu0 %v1120
    %1323 = vmatpush1.bf16.msra.mxu0 %v1119
    %1324 = vmatprep.subr.bf16.mxu0 %v1122
    %1325 = vmatpush1.bf16.msra.mxu0 %v1121
    %1326 = vmatprep.subr.bf16.mxu0 %v1124
    %1327 = vmatpush1.bf16.msra.mxu0 %v1123
    %1328 = vmatprep.subr.bf16.mxu0 %v1126
    %1329 = vmatpush1.bf16.msra.mxu0 %v1125
    %1330 = vmatprep.subr.bf16.mxu0 %v1128
    %1331 = vmatpush1.bf16.msra.mxu0 %v1127
    %1332 = vmatprep.subr.bf16.mxu0 %v1130
    %1333 = vmatpush1.bf16.msra.mxu0 %v1129
    %1334 = vmatprep.subr.bf16.mxu0 %v1132
    %1335 = vmatpush1.bf16.msra.mxu0 %v1131
    %1336 = vmatprep.subr.bf16.mxu0 %v1134
    %1337 = vmatpush1.bf16.msra.mxu0 %v1133
    %1338 = vmatprep.subr.bf16.mxu0 %v1136
    %1339 = vmatpush1.bf16.msra.mxu0 %v1135
    %1340 = vmatprep.subr.bf16.mxu0 %v1138
    %1341 = vmatpush1.bf16.msra.mxu0 %v1137
    %1342 = vmatprep.subr.bf16.mxu0 %v1140
    %1343 = vmatpush1.bf16.msra.mxu0 %v1139
    %1344 = vmatprep.subr.bf16.mxu0 %v1142
    %1345 = vmatpush1.bf16.msra.mxu0 %v1141
    %1346 = vmatprep.subr.bf16.mxu0 %v1144
    %1347 = vmatpush1.bf16.msra.mxu0 %v1143
    %1348 = vmatprep.subr.bf16.mxu0 %v1146
    %1349 = vmatpush1.bf16.msra.mxu0 %v1145
    %1350 = vmatprep.subr.bf16.mxu0 %v1148
    %1351 = vmatpush1.bf16.msra.mxu0 %v1147
    %1352 = vmatprep.subr.bf16.mxu0 %v1150
    %1353 = vmatpush1.bf16.msra.mxu0 %v1149
    %1354 = vmatprep.mubr.bf16.mxu0 %v688
    %1355 = vmatmul.mubr.bf16.gmra.mrb[0].mxu0 %v687
    %v1356 = vpop.f32.mrb[0].mxu0
    %v1357 = vadd.f32 %v1314, %v1356
    %v1358 = vpop.f32.mrb[0].mxu0
    %v1359 = vadd.f32 %v1316, %v1358
    %v1360 = vpop.f32.mrb[0].mxu0
    %v1361 = vadd.f32 %v1318, %v1360
    %v1362 = vpop.f32.mrb[0].mxu0
    %v1363 = vadd.f32 %v1320, %v1362
    %1364 = vdwg.mxu0
    %1365 = vmatprep.subr.bf16.mxu0 %v1152
    %1366 = vmatpush1.bf16.msra.mxu0 %v1151
    %1367 = vmatprep.subr.bf16.mxu0 %v1154
    %1368 = vmatpush1.bf16.msra.mxu0 %v1153
    %1369 = vmatprep.subr.bf16.mxu0 %v1156
    %1370 = vmatpush1.bf16.msra.mxu0 %v1155
    %1371 = vmatprep.subr.bf16.mxu0 %v1158
    %1372 = vmatpush1.bf16.msra.mxu0 %v1157
    %1373 = vmatprep.subr.bf16.mxu0 %v1160
    %1374 = vmatpush1.bf16.msra.mxu0 %v1159
    %1375 = vmatprep.subr.bf16.mxu0 %v1162
    %1376 = vmatpush1.bf16.msra.mxu0 %v1161
    %1377 = vmatprep.subr.bf16.mxu0 %v1164
    %1378 = vmatpush1.bf16.msra.mxu0 %v1163
    %1379 = vmatprep.subr.bf16.mxu0 %v1166
    %1380 = vmatpush1.bf16.msra.mxu0 %v1165
    %1381 = vmatprep.subr.bf16.mxu0 %v1168
    %1382 = vmatpush1.bf16.msra.mxu0 %v1167
    %1383 = vmatprep.subr.bf16.mxu0 %v1170
    %1384 = vmatpush1.bf16.msra.mxu0 %v1169
    %1385 = vmatprep.subr.bf16.mxu0 %v1172
    %1386 = vmatpush1.bf16.msra.mxu0 %v1171
    %1387 = vmatprep.subr.bf16.mxu0 %v1174
    %1388 = vmatpush1.bf16.msra.mxu0 %v1173
    %1389 = vmatprep.subr.bf16.mxu0 %v1176
    %1390 = vmatpush1.bf16.msra.mxu0 %v1175
    %1391 = vmatprep.subr.bf16.mxu0 %v1178
    %1392 = vmatpush1.bf16.msra.mxu0 %v1177
    %1393 = vmatprep.subr.bf16.mxu0 %v1180
    %1394 = vmatpush1.bf16.msra.mxu0 %v1179
    %1395 = vmatprep.subr.bf16.mxu0 %v1182
    %1396 = vmatpush1.bf16.msra.mxu0 %v1181
    %1397 = vmatprep.mubr.bf16.mxu0 %v690
    %1398 = vmatmul.mubr.bf16.gmra.mrb[0].mxu0 %v689
    %v1399 = vpop.f32.mrb[0].mxu0
    %v1400 = vadd.f32 %v1357, %v1399
    %v1401 = vpop.f32.mrb[0].mxu0
    %v1402 = vadd.f32 %v1359, %v1401
    %v1403 = vpop.f32.mrb[0].mxu0
    %v1404 = vadd.f32 %v1361, %v1403
    %v1405 = vpop.f32.mrb[0].mxu0
    %v1406 = vadd.f32 %v1363, %v1405
    %1407 = vdwg.mxu0
    %1408 = vst [vmem:[#allocation2] sm:$0xff] %v1400
    %1409 = vst.msk [vmem:[#allocation2 + $0x8] sm:$0xff] %vm492, %v1402
    %1410 = vst [vmem:[#allocation2 + $0x10] sm:$0xff] %v1404
    %1411 = vst.msk [vmem:[#allocation2 + $0x18] sm:$0xff] %vm492, %v1406
    // Predicated region
    $region22: #{tpu_custom_call.1} parent=1 // pred_check
      _
    $region23: #{tpu_custom_call.1} parent=1 // pred_check_branch
      %1413 = sbr.rel (0) target = $region25
    $region24: #{tpu_custom_call.1} parent=1 // pred_region
      %s1415 = ssub.s32 512, 512
      %1416 = vsyncadd [#allocation3], %s1415
      %s1417 = sshll.u32 [#allocation2], 4
      %s1418 = int_to_ptr.vmem [resolvable:$true] %s1417
      %1423 = dma.vmem_to_hbm [thread:$0]  %s1418, 512, %s5, [#allocation3], 256, 256, 16
    $region25: #{tpu_custom_call.1} parent=1 // pred_fallthru
      _
    // Predicated region
    $region26: #{tpu_custom_call.1} parent=1 // pred_check
      _
    $region27: #{tpu_custom_call.1} parent=1 // pred_check_branch
      %1425 = sbr.rel (0) target = $region29
    $region28: #{tpu_custom_call.1} parent=1 // pred_region
      %1426 = dma.done [#allocation3], 512
    $region29: #{tpu_custom_call.1} parent=1 // pred_fallthru
      _
    %1427 = vsyncpa [#allocation3], 1

</llo_original>
